<compile_context>
chip_gen: v6e
topology: v6e:2x2x1
jax: 0.10.0
libtpu: 0.0.40
codegen_flags: <defaults>
</compile_context>

<pallas_src>
import functools

import jax
import jax.numpy as jnp
from jax import lax
from jax.experimental import pallas as pl
from jax.experimental.pallas import tpu as pltpu

POWER = 0.2
LANES = 128
SUBLANES = 8
# Pad the flat element count to a multiple of 32*128 so the (rows, 128) layout is
# tile-aligned for every dtype (f32: 8 sublanes, bf16: 16, int8/fp8: 32).
ALIGN = 32 * LANES


def _sparsity_partial_kernel(x_ref, part_ref, acc_ref, *, n_valid, n_tiles, tile_rows):
    c = pl.program_id(0)            # shard ("parallel" axis)
    i = pl.program_id(1)            # step within shard ("arbitrary"; accumulator resident)
    steps = pl.num_programs(1)
    tile_idx = c * steps + i        # logical tile index over the whole (rows, 128) slab

    @pl.when(i == 0)
    def _init():
        acc_ref[...] = jnp.zeros_like(acc_ref)

    x = x_ref[...].astype(jnp.float32)
    val = jnp.abs(x) ** POWER       # lowers to exp(0.2*log|x|): 2 EUP transcendentals/elem
    # TODO(synk): on v6e/v7x a bf16 pow would double EUP throughput; skipped (not
    # generation-gated here and it costs accuracy on v5e).

    fold = (tile_rows // SUBLANES, SUBLANES, LANES)

    # Steady state: VPU-only partial-sum accumulate into one (8,128) vreg accumulator.
    @pl.when(tile_idx < n_tiles - 1)
    def _full_tile():
        acc_ref[...] += val.reshape(fold).sum(axis=0)

    # Final (ragged / padded) tile — and any clamped duplicate tile from sharding —
    # is masked against the true element count.
    @pl.when(tile_idx >= n_tiles - 1)
    def _masked_tile():
        row = lax.broadcasted_iota(jnp.int32, (tile_rows, LANES), 0)
        lane = lax.broadcasted_iota(jnp.int32, (tile_rows, LANES), 1)
        elem = (tile_idx * tile_rows + row) * LANES + lane
        masked = jnp.where(elem < n_valid, val, jnp.float32(0.0))
        acc_ref[...] += masked.reshape(fold).sum(axis=0)

    @pl.when(i == steps - 1)
    def _finalize():
        part_ref[0, :, :] = acc_ref[...]


def sparsity_loss(kernel, *, tile_rows=1024, num_shards=2):
    """mean(|kernel| ** 0.2), computed in a Pallas TPU kernel. Returns an f32 scalar."""
    n = kernel.size
    flat = kernel.reshape(-1)                    # native dtype; no host-side f32 cast

    padded = pl.cdiv(n, ALIGN) * ALIGN
    if padded != n:                              # <= 4095 extra elements, masked in-kernel
        flat = jnp.pad(flat, (0, padded - n))
    x2d = flat.reshape(-1, LANES)                # (rows, 128) lane-dense slab
    rows = x2d.shape[0]                          # always a multiple of 32

    # Tile rows: multiple of 32 (covers any dtype's sublane packing), capped at rows.
    tile_rows = max(32, (min(tile_rows, rows) // 32) * 32)
    n_tiles = pl.cdiv(rows, tile_rows)
    num_shards = max(1, min(num_shards, n_tiles))
    steps = pl.cdiv(n_tiles, num_shards)

    def x_index_map(c, i):
        # Clamp so no block DMA is ever fully out of bounds; clamped duplicate tiles
        # are entirely masked away in the kernel (their logical element ids >= n).
        return (jnp.minimum(c * steps + i, n_tiles - 1), 0)

    partials = pl.pallas_call(
        functools.partial(
            _sparsity_partial_kernel,
            n_valid=n, n_tiles=n_tiles, tile_rows=tile_rows),
        out_shape=jax.ShapeDtypeStruct((num_shards, SUBLANES, LANES), jnp.float32),
        grid_spec=pltpu.PrefetchScalarGridSpec(
            num_scalar_prefetch=0,
            grid=(num_shards, steps),
            in_specs=[pl.BlockSpec((tile_rows, LANES), x_index_map)],
            out_specs=pl.BlockSpec((1, SUBLANES, LANES), lambda c, i: (c, 0, 0)),
            scratch_shapes=[pltpu.VMEM((SUBLANES, LANES), jnp.float32)],
        ),
        compiler_params=pltpu.CompilerParams(
            dimension_semantics=("parallel", "arbitrary")),
    )(x2d)

    # One final reduce over the tiny (num_shards, 8, 128) partial sums, then the mean.
    return jnp.sum(partials) / jnp.float32(n)


if __name__ == "__main__":
    key = jax.random.PRNGKey(0)
    # Conv-kernel-like input (PyTorch NCHW conv weights / estimated kernel).
    x = jax.random.normal(key, (2, 4, 16, 16), dtype=jnp.float32)

    loss = jax.block_until_ready(sparsity_loss(x))

    # Pure-JAX reference check.
    ref = jnp.mean(jnp.abs(x) ** POWER)
    assert jnp.allclose(loss, ref, rtol=1e-5, atol=1e-5), (loss, ref)

    print("KERNEL_OK")
</pallas_src>

<mosaic_0001>
module attributes {stable_mosaic.version = 11 : i64} {
  func.func @_sparsity_partial_kernel(%arg0: i32, %arg1: i32, %arg2: memref<32x128xf32, #tpu.memory_space<vmem>>, %arg3: memref<1x8x128xf32, #tpu.memory_space<vmem>>, %arg4: memref<8x128xf32, #tpu.memory_space<vmem>>) attributes {dimension_semantics = [#tpu.dimension_semantics<parallel>, #tpu.dimension_semantics<arbitrary>], iteration_bounds = array<i64: 1, 1>, scalar_prefetch = 0 : i64, scratch_operands = 1 : i64, tpu.core_type = #tpu.core_type<tc>, window_params = [{transform_indices = @transform_0, window_bounds = array<i64: 32, 128>}, {transform_indices = @transform_1, window_bounds = array<i64: 1, 8, 128>}]} {
    %c1_i32 = arith.constant 1 : i32
    %0 = arith.muli %arg0, %c1_i32 : i32
    %1 = arith.addi %0, %arg1 : i32
    %c0_i32 = arith.constant 0 : i32
    %2 = arith.cmpi eq, %arg1, %c0_i32 : i32
    %3 = arith.extui %2 : i1 to i32
    %c0_i32_0 = arith.constant 0 : i32
    %4 = arith.cmpi ne, %3, %c0_i32_0 : i32
    scf.if %4 {
      %cst_8 = arith.constant 0.000000e+00 : f32
      %18 = vector.broadcast %cst_8 : f32 to vector<8x128xf32>
      %c0_9 = arith.constant 0 : index
      %c0_10 = arith.constant 0 : index
      %19 = vector.load %arg4[%c0_9, %c0_10] : memref<8x128xf32, #tpu.memory_space<vmem>>, vector<8x128xf32>
      tpu.vector_store %arg4[%c0_9, %c0_10], %18 {strides = array<i32>} : memref<8x128xf32, #tpu.memory_space<vmem>>, vector<8x128xf32>,
    } else {
    }
    %c0 = arith.constant 0 : index
    %c0_1 = arith.constant 0 : index
    %5 = vector.load %arg2[%c0, %c0_1] : memref<32x128xf32, #tpu.memory_space<vmem>>, vector<32x128xf32>
    %6 = math.absf %5 : vector<32x128xf32>
    %cst = arith.constant 2.000000e-01 : f32
    %7 = vector.broadcast %cst : f32 to vector<32x128xf32>
    %8 = math.powf %6, %7 : vector<32x128xf32>
    %c0_i32_2 = arith.constant 0 : i32
    %9 = arith.cmpi slt, %1, %c0_i32_2 : i32
    %10 = arith.extui %9 : i1 to i32
    %c0_i32_3 = arith.constant 0 : i32
    %11 = arith.cmpi ne, %10, %c0_i32_3 : i32
    scf.if %11 {
      %c0_8 = arith.constant 0 : index
      %c0_9 = arith.constant 0 : index
      %18 = vector.load %arg4[%c0_8, %c0_9] : memref<8x128xf32, #tpu.memory_space<vmem>>, vector<8x128xf32>
      %19 = vector.shape_cast %8 : vector<32x128xf32> to vector<4x8x128xf32>
      %cst_10 = arith.constant dense<0.000000e+00> : vector<8x128xf32>
      %20 = vector.multi_reduction <add>, %19, %cst_10 [0] : vector<4x8x128xf32> to vector<8x128xf32>
      %21 = arith.addf %18, %20 : vector<8x128xf32>
      %c0_11 = arith.constant 0 : index
      %c0_12 = arith.constant 0 : index
      %22 = vector.load %arg4[%c0_11, %c0_12] : memref<8x128xf32, #tpu.memory_space<vmem>>, vector<8x128xf32>
      tpu.vector_store %arg4[%c0_11, %c0_12], %21 {strides = array<i32>} : memref<8x128xf32, #tpu.memory_space<vmem>>, vector<8x128xf32>,
    } else {
    }
    %c0_i32_4 = arith.constant 0 : i32
    %12 = arith.cmpi sge, %1, %c0_i32_4 : i32
    %13 = arith.extui %12 : i1 to i32
    %c0_i32_5 = arith.constant 0 : i32
    %14 = arith.cmpi ne, %13, %c0_i32_5 : i32
    scf.if %14 {
      %18 = tpu.iota {dimensions = array<i32: 0>} : vector<32x128xi32>
      %19 = tpu.iota {dimensions = array<i32: 1>} : vector<32x128xi32>
      %c32_i32 = arith.constant 32 : i32
      %20 = arith.muli %1, %c32_i32 : i32
      %21 = vector.broadcast %20 : i32 to vector<32x128xi32>
      %22 = arith.addi %21, %18 : vector<32x128xi32>
      %c128_i32 = arith.constant 128 : i32
      %23 = vector.broadcast %c128_i32 : i32 to vector<32x128xi32>
      %24 = arith.muli %22, %23 : vector<32x128xi32>
      %25 = arith.addi %24, %19 : vector<32x128xi32>
      %c2048_i32 = arith.constant 2048 : i32
      %26 = vector.broadcast %c2048_i32 : i32 to vector<32x128xi32>
      %27 = arith.cmpi slt, %25, %26 : vector<32x128xi32>
      %cst_8 = arith.constant 0.000000e+00 : f32
      %28 = vector.broadcast %cst_8 : f32 to vector<32x128xf32>
      %29 = arith.select %27, %8, %28 : vector<32x128xi1>, vector<32x128xf32>
      %c0_9 = arith.constant 0 : index
      %c0_10 = arith.constant 0 : index
      %30 = vector.load %arg4[%c0_9, %c0_10] : memref<8x128xf32, #tpu.memory_space<vmem>>, vector<8x128xf32>
      %31 = vector.shape_cast %29 : vector<32x128xf32> to vector<4x8x128xf32>
      %cst_11 = arith.constant dense<0.000000e+00> : vector<8x128xf32>
      %32 = vector.multi_reduction <add>, %31, %cst_11 [0] : vector<4x8x128xf32> to vector<8x128xf32>
      %33 = arith.addf %30, %32 : vector<8x128xf32>
      %c0_12 = arith.constant 0 : index
      %c0_13 = arith.constant 0 : index
      %34 = vector.load %arg4[%c0_12, %c0_13] : memref<8x128xf32, #tpu.memory_space<vmem>>, vector<8x128xf32>
      tpu.vector_store %arg4[%c0_12, %c0_13], %33 {strides = array<i32>} : memref<8x128xf32, #tpu.memory_space<vmem>>, vector<8x128xf32>,
    } else {
    }
    %c0_i32_6 = arith.constant 0 : i32
    %15 = arith.cmpi eq, %arg1, %c0_i32_6 : i32
    %16 = arith.extui %15 : i1 to i32
    %c0_i32_7 = arith.constant 0 : i32
    %17 = arith.cmpi ne, %16, %c0_i32_7 : i32
    scf.if %17 {
      %c0_8 = arith.constant 0 : index
      %c0_9 = arith.constant 0 : index
      %18 = vector.load %arg4[%c0_8, %c0_9] : memref<8x128xf32, #tpu.memory_space<vmem>>, vector<8x128xf32>
      %c0_10 = arith.constant 0 : index
      %c0_11 = arith.constant 0 : index
      %c0_12 = arith.constant 0 : index
      %19 = vector.load %arg3[%c0_10, %c0_11, %c0_12] : memref<1x8x128xf32, #tpu.memory_space<vmem>>, vector<1x8x128xf32>
      %20 = vector.shape_cast %19 : vector<1x8x128xf32> to vector<8x128xf32>
      %21 = vector.shape_cast %18 : vector<8x128xf32> to vector<1x8x128xf32>
      tpu.vector_store %arg3[%c0_10, %c0_11, %c0_12], %21 {strides = array<i32>} : memref<1x8x128xf32, #tpu.memory_space<vmem>>, vector<1x8x128xf32>,
    } else {
    }
    return
  }
  func.func @transform_0(%arg0: i32, %arg1: i32) -> (i32, i32) {
    %c1_i32 = arith.constant 1 : i32
    %0 = arith.muli %arg0, %c1_i32 : i32
    %1 = arith.addi %0, %arg1 : i32
    %c0_i32 = arith.constant 0 : i32
    %2 = arith.minsi %1, %c0_i32 : i32
    %c0_i32_0 = arith.constant 0 : i32
    %c0_i32_1 = arith.constant 0 : i32
    return %2, %c0_i32_0 : i32, i32
  }
  func.func @transform_1(%arg0: i32, %arg1: i32) -> (i32, i32, i32) {
    %c0_i32 = arith.constant 0 : i32
    %c0_i32_0 = arith.constant 0 : i32
    %c0_i32_1 = arith.constant 0 : i32
    return %arg0, %c0_i32, %c0_i32_0 : i32, i32, i32
  }
}

</mosaic_0001>

<llo_original>
// kernel: tpu_custom_call.1
$region0: #{tpu_custom_call.1}
  #allocation0 [shape = 'u32[]', space=smem, size = 0x4, offset = 0x4, fixed_abs, tag = 'smem constant byte address 0x4 - core index']
  #allocation1 [shape = 'u32[144,128]{1,0:T(1,128)}', space=vmem, size = 0x12000, scoped, tag = 'internal scratch']
  #allocation2 [shape = 'f32[8,128]{1,0:T(8,128)}', space=vmem, size = 0x1000, scoped, tag = 'scratch operand']
  %s0 = inlined_call_operand.hbm [shape: f32[32,128], index: 0, kind: input, shape index: {}]
  %s1 = inlined_call_operand.hbm [shape: f32[1,8,128], index: 1, kind: output, shape index: {}]
  %s2 = sld [smem:[#allocation0]]
  $region34: #{tpu_custom_call.1} parent=0
    _
  %s4 = ssub.s32 1, %s2
  %s5 = scalar_select 0, %s4, %s2
  $region1: #{tpu_custom_call.1} parent=0
    #allocation3 [shape = 'u8[16384]{0}', space=vmem, size = 0x4000, scoped, tag = 'input window, operand 0, single buffered']
    #allocation4 [shape = 's32[1]{0}', space=sflag, size = 0x4, scoped, tag = 'scoped memory for tpu_custom_call.1']
    #allocation5 [shape = 's32[1]{0}', space=sflag, size = 0x4, scoped, tag = 'scoped memory for tpu_custom_call.1']
    #allocation6 [shape = 'u8[4096]{0}', space=vmem, size = 0x1000, scoped, tag = 'output window, operand 0, single buffered']
    %6 = vsyncpa [#allocation4], 0
    %7 = vsyncpa [#allocation5], 0
    // Predicated region
    $region2: #{tpu_custom_call.1} parent=1 // pred_check
      _
    $region3: #{tpu_custom_call.1} parent=1 // pred_check_branch
      %9 = sbr.rel (0) target = $region5
    $region4: #{tpu_custom_call.1} parent=1 // pred_region
      %s10 = sadd.s32 0, 0
      %p11 = scmp.lt.s32.totalorder %s10, 0
      %s12 = scalar_select %p11, %s10, 0
      %s13 = smul.u32 4, %s12
      %s15 = ssub.s32 512, 512
      %16 = vsyncadd [#allocation4], %s15
      %s17 = smul.addr %s13, 128
      %s18 = scalar_lea.hbm %s0, %s17
      %s19 = sshll.u32 [#allocation3], 4
      %s20 = int_to_ptr.vmem [resolvable:$true] %s19
      %25 = dma.hbm_to_vmem [thread:$0]  %s18, 512, %s20, [#allocation4], 128, 128, 8
    $region5: #{tpu_custom_call.1} parent=1 // pred_fallthru
      _
    // Predicated region
    $region6: #{tpu_custom_call.1} parent=1 // pred_check
      _
    $region7: #{tpu_custom_call.1} parent=1 // pred_check_branch
      %27 = sbr.rel (0) target = $region9
    $region8: #{tpu_custom_call.1} parent=1 // pred_region
      %28 = dma.done [#allocation4], 512
    $region9: #{tpu_custom_call.1} parent=1 // pred_fallthru
      _
    %s29 = sadd.s32 0, 0
    %p30 = scmp.lt.s32.totalorder %s29, 0
    %s31 = scalar_select %p30, %s29, 0
    %s32 = smul.u32 4, %s31
    %s33 = sadd.s32 0, 0
    %p34 = scmp.eq.s32.totalorder 0, 0
    // Predicated region
    $region10: #{tpu_custom_call.1} parent=1 // pred_check
      %p35 = pneg %p34
    $region11: #{tpu_custom_call.1} parent=1 // pred_check_branch
      %37 = sbr.rel (%p35) target = $region13
    $region12: #{tpu_custom_call.1} parent=1 // pred_region
      %38 = vst [vmem:[#allocation2] sm:$0xff] 0.0
    $region13: #{tpu_custom_call.1} parent=1 // pred_fallthru
      _
    %v39 = vld [vmem:[#allocation3] sm:$0xff]
    %v40 = vld [vmem:[#allocation3 + $0x8] sm:$0xff]
    %v41 = vld [vmem:[#allocation3 + $0x10] sm:$0xff]
    %v42 = vld [vmem:[#allocation3 + $0x18] sm:$0xff]
    %v43 = vand.u32 2147483647, %v39
    %v44 = vand.u32 2147483647, %v40
    %v45 = vand.u32 2147483647, %v41
    %v46 = vand.u32 2147483647, %v42
    %v47 = vpow.f32 %v43, 0.2
    %v48 = vpow.f32 %v44, 0.2
    %v49 = vpow.f32 %v45, 0.2
    %v50 = vpow.f32 %v46, 0.2
    %p51 = scmp.lt.s32.totalorder %s33, 0
    // Predicated region
    $region14: #{tpu_custom_call.1} parent=1 // pred_check
      %p52 = pneg %p51
    $region15: #{tpu_custom_call.1} parent=1 // pred_check_branch
      %54 = sbr.rel (%p52) target = $region17
    $region16: #{tpu_custom_call.1} parent=1 // pred_region
      %v55 = vld [vmem:[#allocation2] sm:$0xff]
      %v56 = vadd.f32 %v47, %v48
      %v57 = vadd.f32 %v56, %v49
      %v58 = vadd.f32 %v57, %v50
      %v59 = vadd.f32 %v55, %v58
      %60 = vst [vmem:[#allocation2] sm:$0xff] %v59
    $region17: #{tpu_custom_call.1} parent=1 // pred_fallthru
      _
    %p61 = scmp.ge.s32.totalorder %s33, 0
    // Predicated region
    $region18: #{tpu_custom_call.1} parent=1 // pred_check
      %p62 = pneg %p61
    $region19: #{tpu_custom_call.1} parent=1 // pred_check_branch
      %64 = sbr.rel (%p62) target = $region21
    $region20: #{tpu_custom_call.1} parent=1 // pred_region
      %v65 = vlaneseq
      %v66 = vshrl.u32 %v65, 7
      %v67 = vadd.s32 %v66, 8
      %v68 = vadd.s32 %v66, 16
      %v69 = vadd.s32 %v66, 24
      %v70 = vlaneseq
      %v71 = vand.u32 %v70, 127
      %s72 = smul.u32 %s33, 32
      %v73 = vstv %s72
      %v74 = vadd.s32 %v73, %v66
      %v75 = vadd.s32 %v73, %v67
      %v76 = vadd.s32 %v73, %v68
      %v77 = vadd.s32 %v73, %v69
      %v78 = vmul.u32 %v74, 128
      %v79 = vmul.u32 %v75, 128
      %v80 = vmul.u32 %v76, 128
      %v81 = vmul.u32 %v77, 128
      %v82 = vadd.s32 %v78, %v71
      %v83 = vadd.s32 %v79, %v71
      %v84 = vadd.s32 %v80, %v71
      %v85 = vadd.s32 %v81, %v71
      %vm86 = vcmp.lt.s32.totalorder %v82, 2048
      %vm87 = vcmp.lt.s32.totalorder %v83, 2048
      %vm88 = vcmp.lt.s32.totalorder %v84, 2048
      %vm89 = vcmp.lt.s32.totalorder %v85, 2048
      %v90 = vsel %vm86, %v47, 0.0
      %v91 = vsel %vm87, %v48, 0.0
      %v92 = vsel %vm88, %v49, 0.0
      %v93 = vsel %vm89, %v50, 0.0
      %v94 = vld [vmem:[#allocation2] sm:$0xff]
      %v95 = vadd.f32 %v90, %v91
      %v96 = vadd.f32 %v95, %v92
      %v97 = vadd.f32 %v96, %v93
      %v98 = vadd.f32 %v94, %v97
      %99 = vst [vmem:[#allocation2] sm:$0xff] %v98
    $region21: #{tpu_custom_call.1} parent=1 // pred_fallthru
      _
    // Predicated region
    $region22: #{tpu_custom_call.1} parent=1 // pred_check
      %p100 = pneg %p34
    $region23: #{tpu_custom_call.1} parent=1 // pred_check_branch
      %102 = sbr.rel (%p100) target = $region25
    $region24: #{tpu_custom_call.1} parent=1 // pred_region
      %v103 = vld [vmem:[#allocation2] sm:$0xff]
      %104 = vst [vmem:[#allocation6] sm:$0xff] %v103
    $region25: #{tpu_custom_call.1} parent=1 // pred_fallthru
      _
    // Predicated region
    $region26: #{tpu_custom_call.1} parent=1 // pred_check
      _
    $region27: #{tpu_custom_call.1} parent=1 // pred_check_branch
      %106 = sbr.rel (0) target = $region29
    $region28: #{tpu_custom_call.1} parent=1 // pred_region
      %s108 = ssub.s32 128, 128
      %109 = vsyncadd [#allocation5], %s108
      %s111 = sshll.u32 [#allocation6], 4
      %s112 = int_to_ptr.vmem [resolvable:$true] %s111
      %114 = dma.vmem_to_hbm [thread:$0]  %s112, 128, %s1, [#allocation5]
    $region29: #{tpu_custom_call.1} parent=1 // pred_fallthru
      _
    // Predicated region
    $region30: #{tpu_custom_call.1} parent=1 // pred_check
      _
    $region31: #{tpu_custom_call.1} parent=1 // pred_check_branch
      %116 = sbr.rel (0) target = $region33
    $region32: #{tpu_custom_call.1} parent=1 // pred_region
      %117 = dma.done [#allocation5], 128
    $region33: #{tpu_custom_call.1} parent=1 // pred_fallthru
      _
    %118 = vsyncpa [#allocation4], 1
    %119 = vsyncpa [#allocation5], 1

</llo_original>
